<compile_context>
chip_gen: v7x
topology: tpu7x:2x2x1
jax: 0.10.0
libtpu: 0.0.40
codegen_flags: <defaults>
</compile_context>

<pallas_src>
import jax
import jax.numpy as jnp
from jax.experimental import pallas as pl
from jax.experimental.pallas import tpu as pltpu

_LANE = 128
_SUBLANE = 8
_NEG_INF = -1e30
_MXU_DTYPE = jnp.bfloat16        # MXU operand dtype; accumulation is always float32.


def _round_up(n: int, m: int) -> int:
    return ((n + m - 1) // m) * m


# ------------------------------- Pallas kernel -------------------------------
def _gm_eps_kernel(s_ref, x_ref, means_t_ref, means_ref, bias_ref, o_ref):
    """Gaussian-mixture score -> epsilon for one batch tile.

    s_ref       : SMEM (3,) f32 scalar prefetch:
                    [sqrt(acp)/s2, sqrt(1-acp)/s2, sqrt(1-acp)*sqrt(acp)/s2]
    x_ref       : VMEM (TB, Dp) f32   batch tile (zero-padded rows / feature lanes)
    means_t_ref : VMEM (Dp, Kp) bf16  pre-transposed means mu^T (zero-padded)
    means_ref   : VMEM (Kp, Dp) bf16  means mu_k (zero-padded)
    bias_ref    : VMEM (1,  Kp) f32   per-timestep logit bias b_k(t) (-1e30 on padding)
    o_ref       : VMEM (TB, Dp) f32   predicted epsilon
    """
    s_xm = s_ref[0]      # sqrt(acp)   / sigma^2   (logits matmul scale)
    c_x = s_ref[1]       # sqrt(1-acp) / sigma^2   (coefficient of x)
    c_m = s_ref[2]       # sqrt(1-acp)*sqrt(acp)/sigma^2  (coefficient of r @ mu)

    x = x_ref[...]                                          # (TB, Dp) f32

    # x . mu_k on the MXU (bf16 operands, f32 accumulation).  The pre-transposed
    # means make this a plain row-major contraction -> no in-kernel XLU transpose.
    xm = jnp.dot(x.astype(_MXU_DTYPE), means_t_ref[...],
                 preferred_element_type=jnp.float32)        # (TB, Kp)

    # Log-responsibility logits, up to an x-only constant that cancels in the softmax.
    logits = bias_ref[...] + s_xm * xm                      # (TB, Kp) f32

    mx = jnp.max(logits, axis=-1, keepdims=True)
    p = jnp.exp(logits - mx)
    denom = jnp.sum(p, axis=-1, keepdims=True)
    # Fold c_m into the (TB, 1) normalization so the (TB, Dp) result needs no rescale.
    r = p * (c_m * pl.reciprocal(denom, approx=True))       # c_m-scaled responsibilities

    # Posterior mixture mean sum_k r_k mu_k on the MXU, then the closed-form epsilon.
    wmean = jnp.dot(r.astype(_MXU_DTYPE), means_ref[...],
                    preferred_element_type=jnp.float32)     # (TB, Dp)
    o_ref[...] = (c_x * x - wmean).astype(o_ref.dtype)


# ------------------------------- module wrapper -------------------------------
class EpsilonNetGM:
    """JAX/Pallas TPU port of the PyTorch EpsilonNetGM module (cov=None path)."""

    def __init__(self, means, weights, alphas_cumprod, cov=None):
        means = jnp.asarray(means, jnp.float32)            # (K, D)
        weights = jnp.asarray(weights, jnp.float32)        # (K,)
        self.means = means
        self.weights = weights
        self.covs = cov
        self.alphas_cumprod = jnp.asarray(alphas_cumprod, jnp.float32)
        if cov is not None:
            # TODO(synk): full per-component covariances need (acp*C_k + (1-acp)I)^-1
            # quadratic forms; only the default cov=None (identity base cov) path is
            # implemented in the Pallas kernel.
            raise NotImplementedError("Pallas EpsilonNetGM only supports cov=None")

        k, d = means.shape
        self._dim = d
        kp = _round_up(k, _LANE)
        dp = _round_up(d, _LANE)

        # Pad the constant mixture parameters ONCE so every pallas_call sees lane-dense
        # (multiple-of-128) tiles and no per-call .astype / pad copies are materialized.
        means_pad_bf16 = jnp.pad(means, ((0, kp - k), (0, dp - d))).astype(_MXU_DTYPE)
        self._means_pad = means_pad_bf16                     # (Kp, Dp) for r @ mu
        self._means_t_pad = means_pad_bf16.T                 # (Dp, Kp) for x @ mu^T

        logw = jnp.log(weights / jnp.sum(weights))           # Categorical(probs=weights)
        logw_pad = jnp.pad(logw, (0, kp - k), constant_values=_NEG_INF)   # (Kp,)
        # ||mu_k||^2 from the bf16-rounded means so the bias matches the MXU operands.
        mnorm2 = jnp.sum(means_pad_bf16.astype(jnp.float32) ** 2, axis=-1)  # (Kp,)

        # Precompute all per-timestep conditioning once (no per-call scalar XLA math).
        acp = self.alphas_cumprod                             # (T,)
        sigma2 = acp * 1.0 + (1.0 - acp)                      # base covariance = I
        inv_s2 = 1.0 / sigma2
        sqrt_acp = jnp.sqrt(acp)
        sqrt_1m = jnp.sqrt(1.0 - acp)
        self._scalar_table = jnp.stack(
            [sqrt_acp * inv_s2,                               # logits matmul scale
             sqrt_1m * inv_s2,                                # epsilon: coeff of x
             sqrt_1m * sqrt_acp * inv_s2],                    # epsilon: coeff of r @ mu
            axis=-1).astype(jnp.float32)                      # (T, 3)
        self._bias_table = (logw_pad[None, :]
                            - 0.5 * (acp * inv_s2)[:, None] * mnorm2[None, :]
                            ).astype(jnp.float32)             # (T, Kp)

    def __call__(self, x, t):
        x = jnp.asarray(x, jnp.float32)
        squeeze = x.ndim == 1
        x2d = x[None, :] if squeeze else x
        b, d = x2d.shape
        if d != self._dim:
            raise ValueError(f"expected feature dim {self._dim}, got {d}")
        kp, dp = self._means_pad.shape

        # Per-timestep conditioning: two tiny gathers from precomputed tables.
        t_idx = jnp.asarray(t).astype(jnp.int32)
        scalars = self._scalar_table[t_idx]                                   # (3,)
        bias_row = jax.lax.dynamic_slice_in_dim(self._bias_table, t_idx, 1, 0)  # (1, Kp)

        # Batch tile: as large as VMEM comfortably allows (capped at 1024 rows), but
        # keep >= 2 grid steps for big single-tile batches so v7x's 2nd TC gets work.
        bp8 = _round_up(b, _SUBLANE)
        max_rows_vmem = max(
            _SUBLANE,
            ((8 * 1024 * 1024) // (16 * dp)) // _SUBLANE * _SUBLANE)  # 2x-buffered x+out
        tile_b = min(1024, bp8, max_rows_vmem)
        if tile_b >= bp8 and bp8 >= 512:
            tile_b = _round_up((bp8 + 1) // 2, _SUBLANE)
        bp = _round_up(bp8, tile_b)

        # Skip the wrapper-side pad (a full HBM copy of the batch) when already aligned.
        if bp == b and dp == d:
            x_in = x2d
        else:
            x_in = jnp.pad(x2d, ((0, bp - b), (0, dp - d)))

        out = pl.pallas_call(
            _gm_eps_kernel,
            out_shape=jax.ShapeDtypeStruct((bp, dp), jnp.float32),
            grid_spec=pltpu.PrefetchScalarGridSpec(
                num_scalar_prefetch=1,
                grid=(bp // tile_b,),
                in_specs=[
                    pl.BlockSpec((tile_b, dp), lambda i, s: (i, 0)),  # x tile
                    pl.BlockSpec((dp, kp), lambda i, s: (0, 0)),      # means^T (resident)
                    pl.BlockSpec((kp, dp), lambda i, s: (0, 0)),      # means (resident)
                    pl.BlockSpec((1, kp), lambda i, s: (0, 0)),       # logit bias b_k(t)
                ],
                out_specs=pl.BlockSpec((tile_b, dp), lambda i, s: (i, 0)),
            ),
            compiler_params=pltpu.CompilerParams(
                dimension_semantics=("parallel",),
                vmem_limit_bytes=32 * 1024 * 1024,
            ),
        )(scalars, x_in, self._means_t_pad, self._means_pad, bias_row)

        out = out[:b, :d]
        return out[0] if squeeze else out

    forward = __call__


# ------------------------------ pure-JAX reference ----------------------------
def _reference_forward(x, t, means, weights, alphas_cumprod):
    """Mirror of the PyTorch module: autodiff of the diffused-mixture log-prob (f32)."""
    acp = alphas_cumprod[jnp.asarray(t).astype(jnp.int32)]
    m = jnp.sqrt(acp) * means
    sigma2 = acp * 1.0 + (1.0 - acp)
    logw = jnp.log(weights / jnp.sum(weights))
    d = means.shape[-1]

    def log_prob_sum(xx):
        d2 = jnp.sum((xx[:, None, :] - m[None, :, :]) ** 2, axis=-1)        # (B, K)
        logp_k = (logw[None, :] - 0.5 * d2 / sigma2
                  - 0.5 * d * jnp.log(2.0 * jnp.pi * sigma2))
        return jnp.sum(jax.scipy.special.logsumexp(logp_k, axis=-1))

    score = jax.grad(log_prob_sum)(x)
    return -jnp.sqrt(1.0 - acp) * score


if __name__ == "__main__":
    B, D, K, T = 8, 32, 8, 1000

    key = jax.random.PRNGKey(0)
    k_means, k_w, k_x = jax.random.split(key, 3)

    means = 3.0 * jax.random.normal(k_means, (K, D), dtype=jnp.float32)
    weights = jax.random.uniform(k_w, (K,), dtype=jnp.float32, minval=0.5, maxval=1.5)
    betas = jnp.linspace(1e-4, 2e-2, T, dtype=jnp.float32)
    alphas_cumprod = jnp.cumprod(1.0 - betas)

    x = jax.random.normal(k_x, (B, D), dtype=jnp.float32)
    t = jnp.asarray(500.0, dtype=jnp.float32)   # float timestep, like `t.to(int)` upstream

    model = EpsilonNetGM(means, weights, alphas_cumprod)
    fwd = jax.jit(lambda xx, tt: model(xx, tt))

    eps = fwd(x, t)
    jax.block_until_ready(eps)

    assert eps.shape == (B, D) and eps.dtype == jnp.float32
    assert bool(jnp.all(jnp.isfinite(eps)))

    # Validate against a pure-JAX autodiff reference (kernel uses bf16 MXU operands and
    # an approximate EUP reciprocal, hence the modest tolerance).
    eps_ref = _reference_forward(x, t, means, weights, alphas_cumprod)
    err = float(jnp.max(jnp.abs(eps - eps_ref)))
    tol = 3e-2 * (1.0 + float(jnp.max(jnp.abs(eps_ref))))
    assert err < tol, f"max abs err {err:.3e} exceeds tol {tol:.3e}"

    print("KERNEL_OK")
</pallas_src>

<mosaic_0001>
module attributes {stable_mosaic.version = 11 : i64} {
  func.func @_gm_eps_kernel(%arg0: i32, %arg1: memref<3xf32, #tpu.memory_space<smem>>, %arg2: memref<8x128xf32, #tpu.memory_space<vmem>>, %arg3: memref<128x128xbf16, #tpu.memory_space<vmem>>, %arg4: memref<128x128xbf16, #tpu.memory_space<vmem>>, %arg5: memref<1x128xf32, #tpu.memory_space<vmem>>, %arg6: memref<8x128xf32, #tpu.memory_space<vmem>>) attributes {dimension_semantics = [#tpu.dimension_semantics<parallel>], iteration_bounds = array<i64: 1>, scalar_prefetch = 1 : i64, scratch_operands = 0 : i64, tpu.core_type = #tpu.core_type<tc>, window_params = [{transform_indices = @transform_0, window_bounds = array<i64: 8, 128>}, {pipeline_mode = #tpu.pipeline_mode<synchronous>, transform_indices = @transform_1, window_bounds = array<i64: 128, 128>}, {pipeline_mode = #tpu.pipeline_mode<synchronous>, transform_indices = @transform_2, window_bounds = array<i64: 128, 128>}, {pipeline_mode = #tpu.pipeline_mode<synchronous>, transform_indices = @transform_3, window_bounds = array<i64: 1, 128>}, {transform_indices = @transform_4, window_bounds = array<i64: 8, 128>}]} {
    %c0 = arith.constant 0 : index
    %0 = memref.load %arg1[%c0] : memref<3xf32, #tpu.memory_space<smem>>
    %c1 = arith.constant 1 : index
    %1 = memref.load %arg1[%c1] : memref<3xf32, #tpu.memory_space<smem>>
    %c2 = arith.constant 2 : index
    %2 = memref.load %arg1[%c2] : memref<3xf32, #tpu.memory_space<smem>>
    %c0_0 = arith.constant 0 : index
    %c0_1 = arith.constant 0 : index
    %3 = vector.load %arg2[%c0_0, %c0_1] : memref<8x128xf32, #tpu.memory_space<vmem>>, vector<8x128xf32>
    %4 = arith.truncf %3 : vector<8x128xf32> to vector<8x128xbf16>
    %c0_2 = arith.constant 0 : index
    %c0_3 = arith.constant 0 : index
    %5 = vector.load %arg3[%c0_2, %c0_3] : memref<128x128xbf16, #tpu.memory_space<vmem>>, vector<128x128xbf16>
    %cst = arith.constant dense<0.000000e+00> : vector<8x128xf32>
    %6 = tpu.matmul %4, %5, %cst {dimension_numbers = #tpu.dot_dimension_numbers<[1], [0], [0], [1], [0, 0, 1, 1], [], []>} : vector<8x128xbf16>, vector<128x128xbf16>, vector<8x128xf32> -> vector<8x128xf32>
    %c0_4 = arith.constant 0 : index
    %c0_5 = arith.constant 0 : index
    %7 = vector.load %arg5[%c0_4, %c0_5] : memref<1x128xf32, #tpu.memory_space<vmem>>, vector<1x128xf32>
    %8 = vector.broadcast %0 : f32 to vector<8x128xf32>
    %9 = arith.mulf %8, %6 : vector<8x128xf32>
    %10 = vector.broadcast %7 : vector<1x128xf32> to vector<8x128xf32>
    %11 = arith.addf %10, %9 : vector<8x128xf32>
    %cst_6 = arith.constant dense<0xFF800000> : vector<8xf32>
    %12 = vector.multi_reduction <maximumf>, %11, %cst_6 [1] : vector<8x128xf32> to vector<8xf32>
    %13 = vector.shape_cast %12 : vector<8xf32> to vector<8x1xf32>
    %14 = vector.broadcast %13 : vector<8x1xf32> to vector<8x128xf32>
    %15 = arith.subf %11, %14 : vector<8x128xf32>
    %16 = math.exp %15 : vector<8x128xf32>
    %cst_7 = arith.constant dense<0.000000e+00> : vector<8xf32>
    %17 = vector.multi_reduction <add>, %16, %cst_7 [1] : vector<8x128xf32> to vector<8xf32>
    %18 = vector.shape_cast %17 : vector<8xf32> to vector<8x1xf32>
    %19 = tpu.reciprocal %18 {approx = true} : vector<8x1xf32> -> vector<8x1xf32>
    %20 = vector.broadcast %2 : f32 to vector<8x1xf32>
    %21 = arith.mulf %20, %19 : vector<8x1xf32>
    %22 = vector.broadcast %21 : vector<8x1xf32> to vector<8x128xf32>
    %23 = arith.mulf %16, %22 : vector<8x128xf32>
    %24 = arith.truncf %23 : vector<8x128xf32> to vector<8x128xbf16>
    %c0_8 = arith.constant 0 : index
    %c0_9 = arith.constant 0 : index
    %25 = vector.load %arg4[%c0_8, %c0_9] : memref<128x128xbf16, #tpu.memory_space<vmem>>, vector<128x128xbf16>
    %cst_10 = arith.constant dense<0.000000e+00> : vector<8x128xf32>
    %26 = tpu.matmul %24, %25, %cst_10 {dimension_numbers = #tpu.dot_dimension_numbers<[1], [0], [0], [1], [0, 0, 1, 1], [], []>} : vector<8x128xbf16>, vector<128x128xbf16>, vector<8x128xf32> -> vector<8x128xf32>
    %27 = vector.broadcast %1 : f32 to vector<8x128xf32>
    %28 = arith.mulf %27, %3 : vector<8x128xf32>
    %29 = arith.subf %28, %26 : vector<8x128xf32>
    %c0_11 = arith.constant 0 : index
    %c0_12 = arith.constant 0 : index
    %30 = vector.load %arg6[%c0_11, %c0_12] : memref<8x128xf32, #tpu.memory_space<vmem>>, vector<8x128xf32>
    tpu.vector_store %arg6[%c0_11, %c0_12], %29 {strides = array<i32>} : memref<8x128xf32, #tpu.memory_space<vmem>>, vector<8x128xf32>,
    return
  }
  func.func @transform_0(%arg0: i32, %arg1: memref<3xf32, #tpu.memory_space<smem>>) -> (i32, i32) {
    %c0_i32 = arith.constant 0 : i32
    %c0_i32_0 = arith.constant 0 : i32
    return %arg0, %c0_i32 : i32, i32
  }
  func.func @transform_1(%arg0: i32, %arg1: memref<3xf32, #tpu.memory_space<smem>>) -> (i32, i32) {
    %c0_i32 = arith.constant 0 : i32
    %c0_i32_0 = arith.constant 0 : i32
    %c0_i32_1 = arith.constant 0 : i32
    return %c0_i32, %c0_i32_0 : i32, i32
  }
  func.func @transform_2(%arg0: i32, %arg1: memref<3xf32, #tpu.memory_space<smem>>) -> (i32, i32) {
    %c0_i32 = arith.constant 0 : i32
    %c0_i32_0 = arith.constant 0 : i32
    %c0_i32_1 = arith.constant 0 : i32
    return %c0_i32, %c0_i32_0 : i32, i32
  }
  func.func @transform_3(%arg0: i32, %arg1: memref<3xf32, #tpu.memory_space<smem>>) -> (i32, i32) {
    %c0_i32 = arith.constant 0 : i32
    %c0_i32_0 = arith.constant 0 : i32
    %c0_i32_1 = arith.constant 0 : i32
    return %c0_i32, %c0_i32_0 : i32, i32
  }
  func.func @transform_4(%arg0: i32, %arg1: memref<3xf32, #tpu.memory_space<smem>>) -> (i32, i32) {
    %c0_i32 = arith.constant 0 : i32
    %c0_i32_0 = arith.constant 0 : i32
    return %arg0, %c0_i32 : i32, i32
  }
}

</mosaic_0001>

<llo_original>
// kernel: _lambda_.1
$region0: #{_lambda_.1}
  #allocation0 [shape = 'u32[]', space=smem, size = 0x4, offset = 0x4, fixed_abs, tag = 'smem constant byte address 0x4 - core index']
  #allocation1 [shape = 'u32[144,128]{1,0:T(1,128)}', space=vmem, size = 0x12000, scoped, tag = 'internal scratch']
  #allocation2 [shape = 's32[1]{0}', space=sflag, size = 0x4, scoped, tag = 'scoped memory for _lambda_.1']
  #allocation3 [shape = 'u8[512]{0}', space=smem, size = 0x200, scoped, tag = 'prefetched SMEM operand 0']
  %s0 = inlined_call_operand.vmem [shape: f32[3], index: 0, kind: input, shape index: {}]
  %s1 = inlined_call_operand.vmem [shape: f32[8,128], index: 1, kind: input, shape index: {}]
  %s2 = inlined_call_operand.hbm [shape: bf16[128,128], index: 2, kind: input, shape index: {}]
  %s3 = inlined_call_operand.vmem [shape: bf16[128,128], index: 3, kind: input, shape index: {}]
  %s4 = inlined_call_operand.vmem [shape: f32[1,128], index: 4, kind: input, shape index: {}]
  %s5 = inlined_call_operand.hbm [shape: f32[8,128], index: 5, kind: output, shape index: {}]
  %s6 = sld [smem:[#allocation0]]
  $region30: #{_lambda_.1} parent=0
    _
  %s8 = ssub.s32 1, %s6
  %s9 = scalar_select 0, %s8, %s6
  %s10 = sshll.u32 %s0, 4
  %s11 = int_to_ptr.vmem [resolvable:$true] %s10
  %13 = dma.vmem_to_smem %s11, 16, [#allocation3], [#allocation2]
  %14 = dma.done [#allocation2], 16
  %15 = sfence
  $region1: #{_lambda_.1} parent=0
    #allocation4 [shape = 'u8[32768]{0}', space=vmem, size = 0x8000, scoped, tag = 'input window, operand 2, single buffered']
    #allocation5 [shape = 's32[1]{0}', space=sflag, size = 0x4, scoped, tag = 'scoped memory for _lambda_.1']
    #allocation6 [shape = 's32[1]{0}', space=sflag, size = 0x4, scoped, tag = 'scoped memory for _lambda_.1']
    #allocation7 [shape = 'u8[4096]{0}', space=vmem, size = 0x1000, scoped, tag = 'output window, operand 0, single buffered']
    %16 = vsyncpa [#allocation5], 0
    %17 = vsyncpa [#allocation6], 0
    // Predicated region
    $region2: #{_lambda_.1} parent=1 // pred_check
      _
    $region3: #{_lambda_.1} parent=1 // pred_check_branch
      %19 = sbr.rel (0) target = $region5
    $region4: #{_lambda_.1} parent=1 // pred_region
      _
    $region5: #{_lambda_.1} parent=1 // pred_fallthru
      _
    // Predicated region
    $region6: #{_lambda_.1} parent=1 // pred_check
      _
    $region7: #{_lambda_.1} parent=1 // pred_check_branch
      %21 = sbr.rel (0) target = $region9
    $region8: #{_lambda_.1} parent=1 // pred_region
      %s23 = ssub.s32 1024, 1024
      %24 = vsyncadd [#allocation5], %s23
      %s25 = sshll.u32 [#allocation4], 4
      %s26 = int_to_ptr.vmem [resolvable:$true] %s25
      %31 = dma.hbm_to_vmem [thread:$0]  %s2, 1024, %s26, [#allocation5], 64, 64, 4
    $region9: #{_lambda_.1} parent=1 // pred_fallthru
      _
    // Predicated region
    $region10: #{_lambda_.1} parent=1 // pred_check
      _
    $region11: #{_lambda_.1} parent=1 // pred_check_branch
      %33 = sbr.rel (0) target = $region13
    $region12: #{_lambda_.1} parent=1 // pred_region
      _
    $region13: #{_lambda_.1} parent=1 // pred_fallthru
      _
    // Predicated region
    $region14: #{_lambda_.1} parent=1 // pred_check
      _
    $region15: #{_lambda_.1} parent=1 // pred_check_branch
      %35 = sbr.rel (0) target = $region17
    $region16: #{_lambda_.1} parent=1 // pred_region
      _
    $region17: #{_lambda_.1} parent=1 // pred_fallthru
      _
    // Predicated region
    $region18: #{_lambda_.1} parent=1 // pred_check
      _
    $region19: #{_lambda_.1} parent=1 // pred_check_branch
      %37 = sbr.rel (0) target = $region21
    $region20: #{_lambda_.1} parent=1 // pred_region
      %38 = dma.done [#allocation5], 1024
    $region21: #{_lambda_.1} parent=1 // pred_fallthru
      _
    %s40 = sld [smem:[#allocation3]]
    %s41 = sld [smem:[#allocation3 + $0x1]]
    %s42 = sld [smem:[#allocation3 + $0x2]]
    %v43 = vld [vmem:[%s1] sm:$0xff]
    %v44 = vpack.c.bf16 %v43, %v43
    %v45 = vld [vmem:[#allocation4] sm:$0xf]
    %v46 = vld [vmem:[#allocation4 + $0x4] sm:$0xf]
    %v47 = vld [vmem:[#allocation4 + $0x8] sm:$0xf]
    %v48 = vld [vmem:[#allocation4 + $0xc] sm:$0xf]
    %v49 = vld [vmem:[#allocation4 + $0x10] sm:$0xf]
    %v50 = vld [vmem:[#allocation4 + $0x14] sm:$0xf]
    %v51 = vld [vmem:[#allocation4 + $0x18] sm:$0xf]
    %v52 = vld [vmem:[#allocation4 + $0x1c] sm:$0xf]
    %v53 = vld [vmem:[#allocation4 + $0x20] sm:$0xf]
    %v54 = vld [vmem:[#allocation4 + $0x24] sm:$0xf]
    %v55 = vld [vmem:[#allocation4 + $0x28] sm:$0xf]
    %v56 = vld [vmem:[#allocation4 + $0x2c] sm:$0xf]
    %v57 = vld [vmem:[#allocation4 + $0x30] sm:$0xf]
    %v58 = vld [vmem:[#allocation4 + $0x34] sm:$0xf]
    %v59 = vld [vmem:[#allocation4 + $0x38] sm:$0xf]
    %v60 = vld [vmem:[#allocation4 + $0x3c] sm:$0xf]
    %v77 = vunpack.c.l.b16 %v45
    %v78 = vunpack.c.l.b16 %v46
    %v79 = vunpack.c.l.b16 %v47
    %v80 = vunpack.c.l.b16 %v48
    %v81 = vunpack.c.l.b16 %v49
    %v82 = vunpack.c.l.b16 %v50
    %v83 = vunpack.c.l.b16 %v51
    %v84 = vunpack.c.l.b16 %v52
    %v85 = vunpack.c.l.b16 %v53
    %v86 = vunpack.c.l.b16 %v54
    %v87 = vunpack.c.l.b16 %v55
    %v88 = vunpack.c.l.b16 %v56
    %v89 = vunpack.c.l.b16 %v57
    %v90 = vunpack.c.l.b16 %v58
    %v91 = vunpack.c.l.b16 %v59
    %v92 = vunpack.c.l.b16 %v60
    %v93 = vpack.c.b16 %v78, %v77
    %v94 = vpack.c.b16 %v80, %v79
    %v95 = vpack.c.b16 %v82, %v81
    %v96 = vpack.c.b16 %v84, %v83
    %v97 = vpack.c.b16 %v86, %v85
    %v98 = vpack.c.b16 %v88, %v87
    %v99 = vpack.c.b16 %v90, %v89
    %v100 = vpack.c.b16 %v92, %v91
    %109 = vmatprep.subr.bf16.mxu0 0
    %110 = vmatpush1.bf16.msra.mxu0 %v93
    %111 = vmatprep.subr.bf16.mxu0 0
    %112 = vmatpush1.bf16.msra.mxu0 %v94
    %113 = vmatprep.subr.bf16.mxu0 0
    %114 = vmatpush1.bf16.msra.mxu0 %v95
    %115 = vmatprep.subr.bf16.mxu0 0
    %116 = vmatpush1.bf16.msra.mxu0 %v96
    %117 = vmatprep.subr.bf16.mxu0 0
    %118 = vmatpush1.bf16.msra.mxu0 %v97
    %119 = vmatprep.subr.bf16.mxu0 0
    %120 = vmatpush1.bf16.msra.mxu0 %v98
    %121 = vmatprep.subr.bf16.mxu0 0
    %122 = vmatpush1.bf16.msra.mxu0 %v99
    %123 = vmatprep.subr.bf16.mxu0 0
    %124 = vmatpush1.bf16.msra.mxu0 %v100
    %125 = vmatprep.subr.bf16.mxu0 0
    %126 = vmatpush1.bf16.msra.mxu0 0
    %127 = vmatprep.subr.bf16.mxu0 0
    %128 = vmatpush1.bf16.msra.mxu0 0
    %129 = vmatprep.subr.bf16.mxu0 0
    %130 = vmatpush1.bf16.msra.mxu0 0
    %131 = vmatprep.subr.bf16.mxu0 0
    %132 = vmatpush1.bf16.msra.mxu0 0
    %133 = vmatprep.subr.bf16.mxu0 0
    %134 = vmatpush1.bf16.msra.mxu0 0
    %135 = vmatprep.subr.bf16.mxu0 0
    %136 = vmatpush1.bf16.msra.mxu0 0
    %137 = vmatprep.subr.bf16.mxu0 0
    %138 = vmatpush1.bf16.msra.mxu0 0
    %139 = vmatprep.subr.bf16.mxu0 0
    %140 = vmatpush1.bf16.msra.mxu0 0
    %141 = vmatprep.mubr.bf16.mxu0 0
    %142 = vmatmul.mubr.bf16.gmra.mrb[0].mxu0 %v44
    %v143 = vpop.f32.mrb[0].mxu0
    %v144 = vadd.f32 0.0, %v143
    %v145 = vpop.f32.mrb[0].mxu0
    %v146 = vpop.f32.mrb[0].mxu0
    %v147 = vpop.f32.mrb[0].mxu0
    %148 = vdwg.mxu0
    %v149 = vld [vmem:[%s4] sm:$0x1]
    %v150 = vstv %s40
    %v151 = vmul.f32 %v150, %v144
    %v153 = vlaneseq
    %v154 = vshrl.u32 %v153, 7
    %v155 = vsub.s32 0, %v154
    %v156 = vrot.slane %v149, %v155
    %v158 = vadd.f32 %v156, %v151
    %159 = vmax.xlane.f32.xlu0 %v158
    %v160 = vpop.xlane.xlu0 %159
    %v161 = vsub.f32 %v158, %v160
    %v162 = vmul.f32 %v161, 1.442695
    %v163 = vpow.pop %v162
    %164 = vadd.xlane.f32.xlu0 %v163
    %v165 = vpop.xlane.xlu0 %164
    %v166 = vrcp.pop %v165
    %v167 = vstv %s42
    %v168 = vmul.f32 %v167, %v166
    %v169 = vmul.f32 %v163, %v168
    %v170 = vpack.c.bf16 %v169, %v169
    %v171 = vld [vmem:[%s3] sm:$0xf]
    %v172 = vld [vmem:[%s3 + $0x4] sm:$0xf]
    %v173 = vld [vmem:[%s3 + $0x8] sm:$0xf]
    %v174 = vld [vmem:[%s3 + $0xc] sm:$0xf]
    %v175 = vld [vmem:[%s3 + $0x10] sm:$0xf]
    %v176 = vld [vmem:[%s3 + $0x14] sm:$0xf]
    %v177 = vld [vmem:[%s3 + $0x18] sm:$0xf]
    %v178 = vld [vmem:[%s3 + $0x1c] sm:$0xf]
    %v179 = vld [vmem:[%s3 + $0x20] sm:$0xf]
    %v180 = vld [vmem:[%s3 + $0x24] sm:$0xf]
    %v181 = vld [vmem:[%s3 + $0x28] sm:$0xf]
    %v182 = vld [vmem:[%s3 + $0x2c] sm:$0xf]
    %v183 = vld [vmem:[%s3 + $0x30] sm:$0xf]
    %v184 = vld [vmem:[%s3 + $0x34] sm:$0xf]
    %v185 = vld [vmem:[%s3 + $0x38] sm:$0xf]
    %v186 = vld [vmem:[%s3 + $0x3c] sm:$0xf]
    %v203 = vunpack.c.l.b16 %v171
    %v204 = vunpack.c.l.b16 %v172
    %v205 = vunpack.c.l.b16 %v173
    %v206 = vunpack.c.l.b16 %v174
    %v207 = vunpack.c.l.b16 %v175
    %v208 = vunpack.c.l.b16 %v176
    %v209 = vunpack.c.l.b16 %v177
    %v210 = vunpack.c.l.b16 %v178
    %v211 = vunpack.c.l.b16 %v179
    %v212 = vunpack.c.l.b16 %v180
    %v213 = vunpack.c.l.b16 %v181
    %v214 = vunpack.c.l.b16 %v182
    %v215 = vunpack.c.l.b16 %v183
    %v216 = vunpack.c.l.b16 %v184
    %v217 = vunpack.c.l.b16 %v185
    %v218 = vunpack.c.l.b16 %v186
    %v219 = vpack.c.b16 %v204, %v203
    %v220 = vpack.c.b16 %v206, %v205
    %v221 = vpack.c.b16 %v208, %v207
    %v222 = vpack.c.b16 %v210, %v209
    %v223 = vpack.c.b16 %v212, %v211
    %v224 = vpack.c.b16 %v214, %v213
    %v225 = vpack.c.b16 %v216, %v215
    %v226 = vpack.c.b16 %v218, %v217
    %235 = vmatprep.subr.bf16.mxu0 0
    %236 = vmatpush1.bf16.msra.mxu0 %v219
    %237 = vmatprep.subr.bf16.mxu0 0
    %238 = vmatpush1.bf16.msra.mxu0 %v220
    %239 = vmatprep.subr.bf16.mxu0 0
    %240 = vmatpush1.bf16.msra.mxu0 %v221
    %241 = vmatprep.subr.bf16.mxu0 0
    %242 = vmatpush1.bf16.msra.mxu0 %v222
    %243 = vmatprep.subr.bf16.mxu0 0
    %244 = vmatpush1.bf16.msra.mxu0 %v223
    %245 = vmatprep.subr.bf16.mxu0 0
    %246 = vmatpush1.bf16.msra.mxu0 %v224
    %247 = vmatprep.subr.bf16.mxu0 0
    %248 = vmatpush1.bf16.msra.mxu0 %v225
    %249 = vmatprep.subr.bf16.mxu0 0
    %250 = vmatpush1.bf16.msra.mxu0 %v226
    %251 = vmatprep.subr.bf16.mxu0 0
    %252 = vmatpush1.bf16.msra.mxu0 0
    %253 = vmatprep.subr.bf16.mxu0 0
    %254 = vmatpush1.bf16.msra.mxu0 0
    %255 = vmatprep.subr.bf16.mxu0 0
    %256 = vmatpush1.bf16.msra.mxu0 0
    %257 = vmatprep.subr.bf16.mxu0 0
    %258 = vmatpush1.bf16.msra.mxu0 0
    %259 = vmatprep.subr.bf16.mxu0 0
    %260 = vmatpush1.bf16.msra.mxu0 0
    %261 = vmatprep.subr.bf16.mxu0 0
    %262 = vmatpush1.bf16.msra.mxu0 0
    %263 = vmatprep.subr.bf16.mxu0 0
    %264 = vmatpush1.bf16.msra.mxu0 0
    %265 = vmatprep.subr.bf16.mxu0 0
    %266 = vmatpush1.bf16.msra.mxu0 0
    %267 = vmatprep.mubr.bf16.mxu0 0
    %268 = vmatmul.mubr.bf16.gmra.mrb[0].mxu0 %v170
    %v269 = vpop.f32.mrb[0].mxu0
    %v270 = vadd.f32 0.0, %v269
    %v271 = vpop.f32.mrb[0].mxu0
    %v272 = vpop.f32.mrb[0].mxu0
    %v273 = vpop.f32.mrb[0].mxu0
    %274 = vdwg.mxu0
    %v275 = vstv %s41
    %v276 = vmul.f32 %v275, %v43
    %v277 = vsub.f32 %v276, %v270
    %278 = vst [vmem:[#allocation7] sm:$0xff] %v277
    // Predicated region
    $region22: #{_lambda_.1} parent=1 // pred_check
      _
    $region23: #{_lambda_.1} parent=1 // pred_check_branch
      %280 = sbr.rel (0) target = $region25
    $region24: #{_lambda_.1} parent=1 // pred_region
      %s282 = ssub.s32 128, 128
      %283 = vsyncadd [#allocation6], %s282
      %s285 = sshll.u32 [#allocation7], 4
      %s286 = int_to_ptr.vmem [resolvable:$true] %s285
      %288 = dma.vmem_to_hbm [thread:$0]  %s286, 128, %s5, [#allocation6]
    $region25: #{_lambda_.1} parent=1 // pred_fallthru
      _
    // Predicated region
    $region26: #{_lambda_.1} parent=1 // pred_check
      _
    $region27: #{_lambda_.1} parent=1 // pred_check_branch
      %290 = sbr.rel (0) target = $region29
    $region28: #{_lambda_.1} parent=1 // pred_region
      %291 = dma.done [#allocation6], 128
    $region29: #{_lambda_.1} parent=1 // pred_fallthru
      _
    %292 = vsyncpa [#allocation5], 1
    %293 = vsyncpa [#allocation6], 1

</llo_original>
